<compile_context>
chip_gen: v5e
topology: v5e:2x2
jax: 0.10.0
libtpu: 0.0.40
codegen_flags: <defaults>
</compile_context>

<pallas_src>
import jax
import jax.numpy as jnp
from jax.experimental import pallas as pl
from jax.experimental.pallas import tpu as pltpu


def _group_linear_kernel(x_ref, w_ref, o_ref):
    # x_ref : (Tb, K)   -- row tile of packed activations, K = N*din
    # w_ref : (K, Tn)   -- column tile of the block-diagonal packed weight
    # o_ref : (Tb, Tn)  -- lane-dense output tile
    o_ref[...] = jnp.dot(
        x_ref[...], w_ref[...], preferred_element_type=jnp.float32
    ).astype(o_ref.dtype)


def _pick_col_tile(m_cols: int) -> int:
    """Column tile for the packed (N*dout) output axis.

    Full width if small / not 128-aligned (always a legal block); otherwise a
    128-multiple tile that yields >=2 grid steps (dual-core v7x) and bounds the
    double-buffered weight tile in VMEM.
    """
    if m_cols % 128 != 0 or m_cols <= 128:
        return m_cols
    for t in (512, 384, 256, 128):
        if m_cols % t == 0 and m_cols // t >= 2:
            return t
    return m_cols


def _pick_row_tile(b_rows: int) -> int:
    """Row (batch) tile: full batch unless it is large and 8-aligned."""
    if b_rows % 8 != 0 or b_rows <= 256:
        return b_rows
    for t in (512, 256):
        if b_rows % t == 0:
            return t
    return b_rows


def make_block_diag(w):
    """(N, din, dout) -> block-diagonal (N*din, N*dout); scatter, no N^2 multiplies."""
    N, Din, Dout = w.shape
    idx = jnp.arange(N)
    w_bd = jnp.zeros((N, Din, N, Dout), dtype=w.dtype).at[idx, :, idx, :].set(w)
    return w_bd.reshape(N * Din, N * Dout)


def group_linear_layer(x, w):
    """Pallas equivalent of GroupLinearLayer.forward.

    x : (batch, num_blocks, din)
    w : (num_blocks, din, dout)
    returns : (batch, num_blocks, dout)
    """
    B, N, Din = x.shape
    Nw, Dw, Dout = w.shape
    assert (Nw, Dw) == (N, Din)

    K = N * Din
    M = N * Dout

    # Free reshape (contiguous row-major): no transpose, no HBM copy.
    x2d = x.reshape(B, K)

    # Block-diagonal packed weight (in a real model this would be precomputed once
    # at parameter-update time, not per forward call).
    w_bd = make_block_diag(w).astype(x.dtype)

    tn = _pick_col_tile(M)
    tb = _pick_row_tile(B)
    grid = (B // tb, M // tn)

    out2d = pl.pallas_call(
        _group_linear_kernel,
        out_shape=jax.ShapeDtypeStruct((B, M), x.dtype),
        grid_spec=pltpu.PrefetchScalarGridSpec(
            num_scalar_prefetch=0,
            grid=grid,
            in_specs=[
                pl.BlockSpec((tb, K), lambda i, j: (i, 0)),   # activations (reused over j)
                pl.BlockSpec((K, tn), lambda i, j: (0, j)),   # packed weight columns
            ],
            out_specs=pl.BlockSpec((tb, tn), lambda i, j: (i, j)),
        ),
        compiler_params=pltpu.CompilerParams(
            dimension_semantics=("parallel", "parallel"),
        ),
    )(x2d, w_bd)

    # Free reshape back to the module's (batch, num_blocks, dout) convention.
    return out2d.reshape(B, N, Dout)


def _reference(x, w):
    """Pure-JAX reference mirroring the PyTorch forward (bmm over blocks)."""
    return jnp.einsum("bnd,ndo->bno", x, w)


if __name__ == "__main__":
    # Small shapes consistent with the module's forward.
    batch = 2
    num_blocks = 4
    din = 16
    dout = 32

    key = jax.random.PRNGKey(0)
    k_x, k_w = jax.random.split(key)

    # Matches the module's init: self.w = 0.01 * randn(num_blocks, din, dout)
    w = 0.01 * jax.random.normal(k_w, (num_blocks, din, dout), dtype=jnp.float32)
    x = jax.random.normal(k_x, (batch, num_blocks, din), dtype=jnp.float32)

    y = group_linear_layer(x, w)
    jax.block_until_ready(y)

    y_ref = _reference(x, w)
    assert y.shape == (batch, num_blocks, dout)
    assert jnp.allclose(y, y_ref, atol=1e-5, rtol=1e-5)

    print("KERNEL_OK")
</pallas_src>

<mosaic_0001>
module attributes {stable_mosaic.version = 11 : i64} {
  func.func @_group_linear_kernel(%arg0: i32, %arg1: i32, %arg2: memref<2x64xf32, #tpu.memory_space<vmem>>, %arg3: memref<64x128xf32, #tpu.memory_space<vmem>>, %arg4: memref<2x128xf32, #tpu.memory_space<vmem>>) attributes {dimension_semantics = [#tpu.dimension_semantics<parallel>, #tpu.dimension_semantics<parallel>], iteration_bounds = array<i64: 1, 1>, scalar_prefetch = 0 : i64, scratch_operands = 0 : i64, tpu.core_type = #tpu.core_type<tc>, window_params = [{transform_indices = @transform_0, window_bounds = array<i64: 2, 64>}, {transform_indices = @transform_1, window_bounds = array<i64: 64, 128>}, {transform_indices = @transform_2, window_bounds = array<i64: 2, 128>}]} {
    %c0 = arith.constant 0 : index
    %c0_0 = arith.constant 0 : index
    %0 = vector.load %arg2[%c0, %c0_0] : memref<2x64xf32, #tpu.memory_space<vmem>>, vector<2x64xf32>
    %c0_1 = arith.constant 0 : index
    %c0_2 = arith.constant 0 : index
    %1 = vector.load %arg3[%c0_1, %c0_2] : memref<64x128xf32, #tpu.memory_space<vmem>>, vector<64x128xf32>
    %cst = arith.constant dense<0.000000e+00> : vector<2x128xf32>
    %2 = tpu.matmul %0, %1, %cst {dimension_numbers = #tpu.dot_dimension_numbers<[1], [0], [0], [1], [0, 0, 1, 1], [], []>} : vector<2x64xf32>, vector<64x128xf32>, vector<2x128xf32> -> vector<2x128xf32>
    %c0_3 = arith.constant 0 : index
    %c0_4 = arith.constant 0 : index
    %3 = vector.load %arg4[%c0_3, %c0_4] : memref<2x128xf32, #tpu.memory_space<vmem>>, vector<2x128xf32>
    tpu.vector_store %arg4[%c0_3, %c0_4], %2 {strides = array<i32>} : memref<2x128xf32, #tpu.memory_space<vmem>>, vector<2x128xf32>,
    return
  }
  func.func @transform_0(%arg0: i32, %arg1: i32) -> (i32, i32) {
    %c0_i32 = arith.constant 0 : i32
    %c0_i32_0 = arith.constant 0 : i32
    return %arg0, %c0_i32 : i32, i32
  }
  func.func @transform_1(%arg0: i32, %arg1: i32) -> (i32, i32) {
    %c0_i32 = arith.constant 0 : i32
    %c0_i32_0 = arith.constant 0 : i32
    return %c0_i32, %arg1 : i32, i32
  }
  func.func @transform_2(%arg0: i32, %arg1: i32) -> (i32, i32) {
    %c0_i32 = arith.constant 0 : i32
    return %arg0, %arg1 : i32, i32
  }
}

</mosaic_0001>

<llo_original>
// kernel: tpu_custom_call.1
$region0: #{tpu_custom_call.1}
  #allocation0 [shape = 'u32[]', space=smem, size = 0x4, offset = 0x4, fixed_abs, tag = 'smem constant byte address 0x4 - core index']
  #allocation1 [shape = 'u32[72,128]{1,0:T(1,128)}', space=vmem, size = 0x9000, scoped, tag = 'internal scratch']
  %s0 = inlined_call_operand.hbm [shape: f32[2,64], index: 0, kind: input, shape index: {}]
  %s1 = inlined_call_operand.hbm [shape: f32[64,128], index: 1, kind: input, shape index: {}]
  %s2 = inlined_call_operand.hbm [shape: f32[2,128], index: 2, kind: output, shape index: {}]
  %s3 = sld [smem:[#allocation0]]
  $region26: #{tpu_custom_call.1} parent=0
    _
  %s5 = ssub.s32 1, %s3
  %s6 = scalar_select 0, %s5, %s3
  $region1: #{tpu_custom_call.1} parent=0
    #allocation2 [shape = 'u8[1024]{0}', space=vmem, size = 0x400, scoped, tag = 'input window, operand 0, single buffered']
    #allocation3 [shape = 's32[1]{0}', space=sflag, size = 0x4, scoped, tag = 'scoped memory for tpu_custom_call.1']
    #allocation4 [shape = 's32[1]{0}', space=sflag, size = 0x4, scoped, tag = 'scoped memory for tpu_custom_call.1']
    #allocation5 [shape = 'u8[32768]{0}', space=vmem, size = 0x8000, scoped, tag = 'input window, operand 1, single buffered']
    #allocation6 [shape = 's32[1]{0}', space=sflag, size = 0x4, scoped, tag = 'scoped memory for tpu_custom_call.1']
    #allocation7 [shape = 'u8[1024]{0}', space=vmem, size = 0x400, scoped, tag = 'output window, operand 0, single buffered']
    %7 = vsyncpa [#allocation3], 0
    %8 = vsyncpa [#allocation6], 0
    %9 = vsyncpa [#allocation4], 0
    // Predicated region
    $region2: #{tpu_custom_call.1} parent=1 // pred_check
      _
    $region3: #{tpu_custom_call.1} parent=1 // pred_check_branch
      %11 = sbr.rel (0) target = $region5
    $region4: #{tpu_custom_call.1} parent=1 // pred_region
      %13 = vsyncadd [#allocation3], 0
      %s15 = sshll.u32 %s0, 4
      %s16 = int_to_ptr.hbm [resolvable:$true] %s15
      %s17 = sshll.u32 [#allocation2], 4
      %s18 = int_to_ptr.vmem [resolvable:$true] %s17
      %20 = dma.hbm_to_vmem [thread:$0]  %s16, 32, %s18, [#allocation3]
    $region5: #{tpu_custom_call.1} parent=1 // pred_fallthru
      _
    // Predicated region
    $region6: #{tpu_custom_call.1} parent=1 // pred_check
      _
    $region7: #{tpu_custom_call.1} parent=1 // pred_check_branch
      %22 = sbr.rel (0) target = $region9
    $region8: #{tpu_custom_call.1} parent=1 // pred_region
      %24 = vsyncadd [#allocation6], 0
      %s25 = sshll.u32 %s1, 4
      %s26 = int_to_ptr.hbm [resolvable:$true] %s25
      %s27 = sshll.u32 [#allocation5], 4
      %s28 = int_to_ptr.vmem [resolvable:$true] %s27
      %33 = dma.hbm_to_vmem [thread:$0]  %s26, 1024, %s28, [#allocation6], 128, 128, 8
    $region9: #{tpu_custom_call.1} parent=1 // pred_fallthru
      _
    // Predicated region
    $region10: #{tpu_custom_call.1} parent=1 // pred_check
      _
    $region11: #{tpu_custom_call.1} parent=1 // pred_check_branch
      %35 = sbr.rel (0) target = $region13
    $region12: #{tpu_custom_call.1} parent=1 // pred_region
      %37 = dma.done [#allocation3], 32
    $region13: #{tpu_custom_call.1} parent=1 // pred_fallthru
      _
    // Predicated region
    $region14: #{tpu_custom_call.1} parent=1 // pred_check
      _
    $region15: #{tpu_custom_call.1} parent=1 // pred_check_branch
      %39 = sbr.rel (0) target = $region17
    $region16: #{tpu_custom_call.1} parent=1 // pred_region
      %41 = dma.done [#allocation6], 1024
    $region17: #{tpu_custom_call.1} parent=1 // pred_fallthru
      _
    %v42 = vld [vmem:[#allocation2] sm:$0x3]
    %v43 = vld [vmem:[#allocation5] sm:$0xff]
    %v44 = vld [vmem:[#allocation5 + $0x8] sm:$0xff]
    %v45 = vld [vmem:[#allocation5 + $0x10] sm:$0xff]
    %v46 = vld [vmem:[#allocation5 + $0x18] sm:$0xff]
    %v47 = vld [vmem:[#allocation5 + $0x20] sm:$0xff]
    %v48 = vld [vmem:[#allocation5 + $0x28] sm:$0xff]
    %v49 = vld [vmem:[#allocation5 + $0x30] sm:$0xff]
    %v50 = vld [vmem:[#allocation5 + $0x38] sm:$0xff]
    %vm51 = vcmask 523264
    %v53 = vsel %vm51, %v42, 0
    %55 = vmatpush.msra.mxu0 0.0
    %56 = vmatpush.msra.mxu0 0.0
    %57 = vmatpush.msra.mxu0 0.0
    %58 = vmatpush.msra.mxu0 0.0
    %59 = vmatpush.msra.mxu0 0.0
    %60 = vmatpush.msra.mxu0 0.0
    %61 = vmatpush.msra.mxu0 0.0
    %62 = vmatpush.msra.mxu0 0.0
    %63 = vmatpush.msra.mxu0 %v50
    %64 = vmatpush.msra.mxu0 %v49
    %65 = vmatpush.msra.mxu0 %v48
    %66 = vmatpush.msra.mxu0 %v47
    %67 = vmatpush.msra.mxu0 %v46
    %68 = vmatpush.msra.mxu0 %v45
    %69 = vmatpush.msra.mxu0 %v44
    %70 = vmatpush.msra.mxu0 %v43
    %71 = vmatmul.f32.gmra.mxu0 %v53
    %v72 = vpop.f32.mrf.mxu0
    %v73 = vadd.f32 0.0, %v72
    %74 = vdwg.mxu0
    %75 = vst [vmem:[#allocation7] sm:$0x3] %v73
    // Predicated region
    $region18: #{tpu_custom_call.1} parent=1 // pred_check
      _
    $region19: #{tpu_custom_call.1} parent=1 // pred_check_branch
      %77 = sbr.rel (0) target = $region21
    $region20: #{tpu_custom_call.1} parent=1 // pred_region
      %79 = vsyncadd [#allocation4], 0
      %s81 = sshll.u32 [#allocation7], 4
      %s82 = int_to_ptr.vmem [resolvable:$true] %s81
      %s83 = sshll.u32 %s2, 4
      %s84 = int_to_ptr.hbm [resolvable:$true] %s83
      %86 = dma.vmem_to_hbm [thread:$0]  %s82, 32, %s84, [#allocation4]
    $region21: #{tpu_custom_call.1} parent=1 // pred_fallthru
      _
    // Predicated region
    $region22: #{tpu_custom_call.1} parent=1 // pred_check
      _
    $region23: #{tpu_custom_call.1} parent=1 // pred_check_branch
      %88 = sbr.rel (0) target = $region25
    $region24: #{tpu_custom_call.1} parent=1 // pred_region
      %90 = dma.done [#allocation4], 32
    $region25: #{tpu_custom_call.1} parent=1 // pred_fallthru
      _
    %91 = vsyncpa [#allocation3], 1
    %92 = vsyncpa [#allocation6], 1
    %93 = vsyncpa [#allocation4], 1

</llo_original>
